<compile_context>
chip_gen: v7x
topology: tpu7x:2x2x1
jax: 0.10.0
libtpu: 0.0.40
codegen_flags: <defaults>
</compile_context>

<pallas_src>
import jax
import jax.numpy as jnp
from jax.experimental import pallas as pl
from jax.experimental.pallas import tpu as pltpu


def _round_up(x, m):
    return (x + m - 1) // m * m


# ---------------------------------------------------------------------------
# Kernels
# ---------------------------------------------------------------------------

def dfa_kernel_composed(x1_ref, x2_ref, w_ref, b_ref, o_ref):
    """One (N-tile, batch) block, fc and fc_out composed into a single affine.

    x1_ref, x2_ref : (C_pad, tn)     channel x position tiles of the branches
    w_ref          : (C_pad, C_pad)  bf16, w2_eff @ w1_eff (both BNs folded)
    b_ref          : (C_pad, 1)      f32,  w2_eff @ b1_eff + b2_eff
    o_ref          : (C_pad, tn)     output tile
    """
    x1 = x1_ref[...]
    x2 = x2_ref[...]
    u = (x1 + x2).astype(w_ref.dtype)                                 # bf16 -> MXU
    g = jnp.dot(w_ref[...], u, preferred_element_type=jnp.float32) + b_ref[...]
    attn = jax.nn.sigmoid(g)                                          # f32, EUP
    # a*x1 + (1-a)*x2  ==  x2 + a*(x1 - x2)
    o_ref[...] = (x2 + attn * (x1 - x2)).astype(o_ref.dtype)


def dfa_kernel_two_stage(x1_ref, x2_ref, w1_ref, b1_ref, w2_ref, b2_ref, o_ref):
    """Two-matmul path for d << C (bottleneck actually saves MXU work).

    w1_ref : (d_pad, C_pad) bf16   b1_ref : (d_pad, 1) f32
    w2_ref : (C_pad, d_pad) bf16   b2_ref : (C_pad, 1) f32
    """
    x1 = x1_ref[...]
    x2 = x2_ref[...]
    u = (x1 + x2).astype(w1_ref.dtype)
    z = jnp.dot(w1_ref[...], u, preferred_element_type=jnp.float32) + b1_ref[...]
    g = jnp.dot(w2_ref[...], z.astype(w2_ref.dtype),
                preferred_element_type=jnp.float32) + b2_ref[...]
    attn = jax.nn.sigmoid(g)
    o_ref[...] = (x2 + attn * (x1 - x2)).astype(o_ref.dtype)


# ---------------------------------------------------------------------------
# Wrapper helpers
# ---------------------------------------------------------------------------

def _fold_bn_into_weight(w, conv_bias, gamma, beta, running_mean, running_var,
                         eps=1e-5):
    """BN(conv(u)) == (scale[:,None]*w) @ u + (beta + scale*(conv_bias - mean))."""
    inv_std = 1.0 / jnp.sqrt(running_var + eps)
    scale = gamma * inv_std                                  # (out,)
    w_eff = w * scale[:, None]                               # (out, in)
    b_eff = beta + scale * (conv_bias - running_mean)        # (out,)
    return w_eff, b_eff


def _vmem_plan():
    """(data_budget_bytes, vmem_limit_bytes) chosen per TPU generation."""
    try:
        cap = int(getattr(pltpu.get_tpu_info(), "vmem_capacity_bytes", 64 << 20))
    except Exception:
        cap = 64 << 20                       # conservative (v7x-sized) fallback
    if cap >= (96 << 20):                    # v5e / v6e: 128 MiB physical VMEM
        return 40 << 20, 96 << 20
    return 20 << 20, 40 << 20                # v7x: 64 MiB per TensorCore


def _choose_tile_n(c_pad, d_pad, n_pad, batch, x_itemsize, composed,
                   data_budget):
    """Largest lane-dense N tile that (a) divides n_pad and (b) fits the budget.

    Budget accounting covers the double-buffered streamed tiles (x1, x2, out),
    the in-kernel temporaries (bf16 u, f32 logits/attn/blend, f32 z for the
    two-stage path) and the double-buffered weight/bias constants.
    """
    stream = 6 * c_pad * x_itemsize              # x1 + x2 + out, double-buffered
    temps = c_pad * (2 + 4 + 4 + 4)              # u(bf16) + g + attn + blend (f32)
    if not composed:
        temps += d_pad * (4 + 2)                 # z (f32) + bf16 recast
    per_lane = stream + temps

    if composed:
        const_bytes = c_pad * c_pad * 2 + c_pad * 4
    else:
        const_bytes = 2 * c_pad * d_pad * 2 + (c_pad + d_pad) * 4
    const_bytes *= 2                             # pipeline double-buffers them

    avail = max(data_budget - const_bytes, 128 * per_lane)
    k_budget = max(1, avail // (128 * per_lane))

    m = n_pad // 128
    k = 1
    for cand in range(1, min(m, k_budget) + 1):  # largest divisor of m <= budget
        if m % cand == 0:
            k = cand
    # Keep at least 2 total grid steps when possible so a 2-TC chip (v7x
    # megacore) has parallel work to split.
    if (m // k) * batch < 2 and k % 2 == 0:
        k //= 2
    return k * 128


# ---------------------------------------------------------------------------
# Forward
# ---------------------------------------------------------------------------

@jax.jit
def dfa_forward(x1, x2, params):
    """DFA forward.  x1, x2: (B, C, N).  Returns (B, C, N) in x1.dtype."""
    B, C, N = x1.shape
    w1, cb1, g1, be1, m1, v1 = params["fc"]
    w2, cb2, g2, be2, m2, v2 = params["fc_out"]
    d = w1.shape[0]

    # Fold conv bias + inference BatchNorm straight into the weights / biases.
    w1_eff, b1_eff = _fold_bn_into_weight(w1, cb1, g1, be1, m1, v1)   # (d, C), (d,)
    w2_eff, b2_eff = _fold_bn_into_weight(w2, cb2, g2, be2, m2, v2)   # (C, d), (C,)

    C_pad = _round_up(C, 8)          # sublane alignment for channels
    d_pad = _round_up(d, 8)
    N_pad = _round_up(N, 128)        # minimal lane alignment (not tile-multiple)

    # Compose the two affine layers when it does not increase MXU work.
    # (Valid because there is no activation between fc/BN1 and fc_out/BN2.)
    composed = C_pad <= 2 * d_pad

    data_budget, vmem_limit = _vmem_plan()
    itemsize = jnp.dtype(x1.dtype).itemsize
    tn = _choose_tile_n(C_pad, d_pad, N_pad, B, itemsize, composed, data_budget)
    n_tiles = N_pad // tn

    # Pad only when needed (each pad / slice costs an extra HBM pass in XLA).
    pad_c, pad_n = C_pad - C, N_pad - N
    if pad_c or pad_n:
        x1_p = jnp.pad(x1, ((0, 0), (0, pad_c), (0, pad_n)))
        x2_p = jnp.pad(x2, ((0, 0), (0, pad_c), (0, pad_n)))
    else:
        x1_p, x2_p = x1, x2

    mxu_dtype = jnp.bfloat16

    x_spec = pl.BlockSpec((None, C_pad, tn), lambda j, b: (b, 0, j))
    out_spec = pl.BlockSpec((None, C_pad, tn), lambda j, b: (b, 0, j))

    if composed:
        w_comb = jnp.dot(w2_eff, w1_eff, preferred_element_type=jnp.float32)
        b_comb = jnp.dot(w2_eff, b1_eff, preferred_element_type=jnp.float32) + b2_eff
        w_p = jnp.pad(w_comb, ((0, pad_c), (0, pad_c))).astype(mxu_dtype)
        b_p = jnp.pad(b_comb, ((0, pad_c),)).reshape(C_pad, 1).astype(jnp.float32)
        kernel = dfa_kernel_composed
        consts = (w_p, b_p)
        const_specs = [
            pl.BlockSpec((C_pad, C_pad), lambda j, b: (0, 0)),
            pl.BlockSpec((C_pad, 1), lambda j, b: (0, 0)),
        ]
    else:
        w1_p = jnp.pad(w1_eff, ((0, d_pad - d), (0, pad_c))).astype(mxu_dtype)
        b1_p = jnp.pad(b1_eff, ((0, d_pad - d),)).reshape(d_pad, 1).astype(jnp.float32)
        w2_p = jnp.pad(w2_eff, ((0, pad_c), (0, d_pad - d))).astype(mxu_dtype)
        b2_p = jnp.pad(b2_eff, ((0, pad_c),)).reshape(C_pad, 1).astype(jnp.float32)
        kernel = dfa_kernel_two_stage
        consts = (w1_p, b1_p, w2_p, b2_p)
        const_specs = [
            pl.BlockSpec((d_pad, C_pad), lambda j, b: (0, 0)),
            pl.BlockSpec((d_pad, 1), lambda j, b: (0, 0)),
            pl.BlockSpec((C_pad, d_pad), lambda j, b: (0, 0)),
            pl.BlockSpec((C_pad, 1), lambda j, b: (0, 0)),
        ]

    out_pad = pl.pallas_call(
        kernel,
        out_shape=jax.ShapeDtypeStruct((B, C_pad, N_pad), x1.dtype),
        grid_spec=pltpu.PrefetchScalarGridSpec(
            num_scalar_prefetch=0,
            grid=(n_tiles, B),              # N-tiles leading -> megacore splits N
            in_specs=[x_spec, x_spec] + const_specs,
            out_specs=out_spec,
        ),
        compiler_params=pltpu.CompilerParams(
            dimension_semantics=("parallel", "parallel"),
            vmem_limit_bytes=vmem_limit,
        ),
    )(x1_p, x2_p, *consts)

    if pad_c or pad_n:
        return out_pad[:, :C, :N]
    return out_pad


# ---------------------------------------------------------------------------
# Parameters / reference / test
# ---------------------------------------------------------------------------

def init_dfa_params(key, features, M=2, r=1, L=32):
    """Deterministic synthetic parameters matching the PyTorch module shapes."""
    d = max(int(features / r), L)
    ks = jax.random.split(key, 8)

    # fc: Conv1d(features -> d, k=1) + BatchNorm1d(d)
    w1 = jax.random.normal(ks[0], (d, features), jnp.float32) * 0.1
    b1 = jax.random.normal(ks[1], (d,), jnp.float32) * 0.1
    g1 = 1.0 + 0.1 * jax.random.normal(ks[2], (d,), jnp.float32)
    be1 = 0.1 * jax.random.normal(ks[3], (d,), jnp.float32)
    m1 = jnp.zeros((d,), jnp.float32)
    v1 = jnp.ones((d,), jnp.float32)

    # fc_out: Conv1d(d -> features, k=1) + BatchNorm1d(features)
    w2 = jax.random.normal(ks[4], (features, d), jnp.float32) * 0.1
    b2 = jax.random.normal(ks[5], (features,), jnp.float32) * 0.1
    g2 = 1.0 + 0.1 * jax.random.normal(ks[6], (features,), jnp.float32)
    be2 = 0.1 * jax.random.normal(ks[7], (features,), jnp.float32)
    m2 = jnp.zeros((features,), jnp.float32)
    v2 = jnp.ones((features,), jnp.float32)

    return {"fc": (w1, b1, g1, be1, m1, v1),
            "fc_out": (w2, b2, g2, be2, m2, v2)}


def dfa_reference(x1, x2, params, eps=1e-5):
    """Pure-JAX f32 reference (same math as the PyTorch module, BN eval mode)."""
    w1, cb1, g1, be1, m1, v1 = params["fc"]
    w2, cb2, g2, be2, m2, v2 = params["fc_out"]
    u = x1 + x2                                                   # (B, C, N)
    z = jnp.einsum("dc,bcn->bdn", w1, u) + cb1[None, :, None]
    z = (z - m1[None, :, None]) / jnp.sqrt(v1[None, :, None] + eps) \
        * g1[None, :, None] + be1[None, :, None]
    c = jnp.einsum("cd,bdn->bcn", w2, z) + cb2[None, :, None]
    c = (c - m2[None, :, None]) / jnp.sqrt(v2[None, :, None] + eps) \
        * g2[None, :, None] + be2[None, :, None]
    a = jax.nn.sigmoid(c)
    return a * x1 + (1.0 - a) * x2


if __name__ == "__main__":
    key = jax.random.PRNGKey(0)
    k1, k2, k3, k4, k5, k6 = jax.random.split(key, 6)

    # Tolerance accounts for the bf16 MXU path (f32 accumulation).
    ATOL = RTOL = 2e-2

    # Case 1: small shapes, d >= C  -> composed single-matmul path.
    B, C, N = 2, 4, 16
    x1 = jax.random.normal(k1, (B, C, N), jnp.float32)
    x2 = jax.random.normal(k2, (B, C, N), jnp.float32)
    params = init_dfa_params(k3, features=C)
    out = jax.block_until_ready(dfa_forward(x1, x2, params))
    ref = dfa_reference(x1, x2, params)
    assert out.shape == (B, C, N)
    assert jnp.allclose(out, ref, atol=ATOL, rtol=RTOL), (
        "composed-path mismatch, max abs err = "
        f"{float(jnp.max(jnp.abs(out - ref)))}")

    # Case 2: d << C (r = 4)  -> two-stage matmul path.
    B2, C2, N2 = 2, 80, 16
    y1 = jax.random.normal(k4, (B2, C2, N2), jnp.float32)
    y2 = jax.random.normal(k5, (B2, C2, N2), jnp.float32)
    params2 = init_dfa_params(k6, features=C2, r=4)
    out2 = jax.block_until_ready(dfa_forward(y1, y2, params2))
    ref2 = dfa_reference(y1, y2, params2)
    assert out2.shape == (B2, C2, N2)
    assert jnp.allclose(out2, ref2, atol=ATOL, rtol=RTOL), (
        "two-stage-path mismatch, max abs err = "
        f"{float(jnp.max(jnp.abs(out2 - ref2)))}")

    print("KERNEL_OK")
</pallas_src>

<mosaic_0001>
module attributes {stable_mosaic.version = 11 : i64} {
  func.func @dfa_kernel_composed(%arg0: i32, %arg1: i32, %arg2: memref<1x8x128xf32, #tpu.memory_space<vmem>>, %arg3: memref<1x8x128xf32, #tpu.memory_space<vmem>>, %arg4: memref<8x8xbf16, #tpu.memory_space<vmem>>, %arg5: memref<8x1xf32, #tpu.memory_space<vmem>>, %arg6: memref<1x8x128xf32, #tpu.memory_space<vmem>>) attributes {dimension_semantics = [#tpu.dimension_semantics<parallel>, #tpu.dimension_semantics<parallel>], iteration_bounds = array<i64: 1, 2>, scalar_prefetch = 0 : i64, scratch_operands = 0 : i64, tpu.core_type = #tpu.core_type<tc>, window_params = [{transform_indices = @transform_0, window_bounds = array<i64: 1, 8, 128>}, {transform_indices = @transform_1, window_bounds = array<i64: 1, 8, 128>}, {pipeline_mode = #tpu.pipeline_mode<synchronous>, transform_indices = @transform_2, window_bounds = array<i64: 8, 8>}, {pipeline_mode = #tpu.pipeline_mode<synchronous>, transform_indices = @transform_3, window_bounds = array<i64: 8, 1>}, {transform_indices = @transform_4, window_bounds = array<i64: 1, 8, 128>}]} {
    %c0 = arith.constant 0 : index
    %c0_0 = arith.constant 0 : index
    %c0_1 = arith.constant 0 : index
    %0 = vector.load %arg2[%c0, %c0_0, %c0_1] : memref<1x8x128xf32, #tpu.memory_space<vmem>>, vector<1x8x128xf32>
    %1 = vector.shape_cast %0 : vector<1x8x128xf32> to vector<8x128xf32>
    %c0_2 = arith.constant 0 : index
    %c0_3 = arith.constant 0 : index
    %c0_4 = arith.constant 0 : index
    %2 = vector.load %arg3[%c0_2, %c0_3, %c0_4] : memref<1x8x128xf32, #tpu.memory_space<vmem>>, vector<1x8x128xf32>
    %3 = vector.shape_cast %2 : vector<1x8x128xf32> to vector<8x128xf32>
    %4 = arith.addf %1, %3 : vector<8x128xf32>
    %5 = arith.truncf %4 : vector<8x128xf32> to vector<8x128xbf16>
    %c0_5 = arith.constant 0 : index
    %c0_6 = arith.constant 0 : index
    %6 = vector.load %arg4[%c0_5, %c0_6] : memref<8x8xbf16, #tpu.memory_space<vmem>>, vector<8x8xbf16>
    %cst = arith.constant dense<0.000000e+00> : vector<8x128xf32>
    %7 = tpu.matmul %6, %5, %cst {dimension_numbers = #tpu.dot_dimension_numbers<[1], [0], [0], [1], [0, 0, 1, 1], [], []>} : vector<8x8xbf16>, vector<8x128xbf16>, vector<8x128xf32> -> vector<8x128xf32>
    %c0_7 = arith.constant 0 : index
    %c0_8 = arith.constant 0 : index
    %8 = vector.load %arg5[%c0_7, %c0_8] : memref<8x1xf32, #tpu.memory_space<vmem>>, vector<8x1xf32>
    %9 = vector.broadcast %8 : vector<8x1xf32> to vector<8x128xf32>
    %10 = arith.addf %7, %9 : vector<8x128xf32>
    %11 = arith.negf %10 : vector<8x128xf32>
    %12 = math.exp %11 : vector<8x128xf32>
    %cst_9 = arith.constant 1.000000e+00 : f32
    %13 = vector.broadcast %cst_9 : f32 to vector<8x128xf32>
    %14 = arith.addf %13, %12 : vector<8x128xf32>
    %15 = arith.divf %13, %14 : vector<8x128xf32>
    %16 = arith.subf %1, %3 : vector<8x128xf32>
    %17 = arith.mulf %15, %16 : vector<8x128xf32>
    %18 = arith.addf %3, %17 : vector<8x128xf32>
    %c0_10 = arith.constant 0 : index
    %c0_11 = arith.constant 0 : index
    %c0_12 = arith.constant 0 : index
    %19 = vector.load %arg6[%c0_10, %c0_11, %c0_12] : memref<1x8x128xf32, #tpu.memory_space<vmem>>, vector<1x8x128xf32>
    %20 = vector.shape_cast %19 : vector<1x8x128xf32> to vector<8x128xf32>
    %21 = vector.shape_cast %18 : vector<8x128xf32> to vector<1x8x128xf32>
    tpu.vector_store %arg6[%c0_10, %c0_11, %c0_12], %21 {strides = array<i32>} : memref<1x8x128xf32, #tpu.memory_space<vmem>>, vector<1x8x128xf32>,
    return
  }
  func.func @transform_0(%arg0: i32, %arg1: i32) -> (i32, i32, i32) {
    %c0_i32 = arith.constant 0 : i32
    %c0_i32_0 = arith.constant 0 : i32
    return %arg1, %c0_i32, %arg0 : i32, i32, i32
  }
  func.func @transform_1(%arg0: i32, %arg1: i32) -> (i32, i32, i32) {
    %c0_i32 = arith.constant 0 : i32
    %c0_i32_0 = arith.constant 0 : i32
    return %arg1, %c0_i32, %arg0 : i32, i32, i32
  }
  func.func @transform_2(%arg0: i32, %arg1: i32) -> (i32, i32) {
    %c0_i32 = arith.constant 0 : i32
    %c0_i32_0 = arith.constant 0 : i32
    %c0_i32_1 = arith.constant 0 : i32
    return %c0_i32, %c0_i32_0 : i32, i32
  }
  func.func @transform_3(%arg0: i32, %arg1: i32) -> (i32, i32) {
    %c0_i32 = arith.constant 0 : i32
    %c0_i32_0 = arith.constant 0 : i32
    %c0_i32_1 = arith.constant 0 : i32
    return %c0_i32, %c0_i32_0 : i32, i32
  }
  func.func @transform_4(%arg0: i32, %arg1: i32) -> (i32, i32, i32) {
    %c0_i32 = arith.constant 0 : i32
    %c0_i32_0 = arith.constant 0 : i32
    return %arg1, %c0_i32, %arg0 : i32, i32, i32
  }
}

</mosaic_0001>

<llo_original>
// kernel: dfa_forward.1
$region0: #{dfa_forward.1}
  #allocation0 [shape = 'u32[]', space=smem, size = 0x4, offset = 0x4, fixed_abs, tag = 'smem constant byte address 0x4 - core index']
  #allocation1 [shape = 'u32[144,128]{1,0:T(1,128)}', space=vmem, size = 0x12000, scoped, tag = 'internal scratch']
  %s0 = inlined_call_operand.vmem [shape: f32[2,8,128], index: 0, kind: input, shape index: {}]
  %s1 = inlined_call_operand.vmem [shape: f32[2,8,128], index: 1, kind: input, shape index: {}]
  %s2 = inlined_call_operand.vmem [shape: bf16[8,8], index: 2, kind: input, shape index: {}]
  %s3 = inlined_call_operand.vmem [shape: f32[8,1], index: 3, kind: input, shape index: {}]
  %s4 = inlined_call_operand.vmem [shape: f32[2,8,128], index: 4, kind: output, shape index: {}]
  %s5 = sld [smem:[#allocation0]]
  $region49: #{dfa_forward.1} parent=0
    _
  %s7 = ssub.s32 1, %s5
  %s8 = scalar_select 0, %s7, %s5
  loop: start=0, step=1, limit=4
  $region2: #{dfa_forward.1} parent=0 // loop_pre_header
    _
  $region3: #{dfa_forward.1} parent=0 // loop_header
    %s10 = sphi 0, %s14
    %p11 = scmp.ge.s32.totalorder %s10, 4
    %s17 = sphi 0, %s29
    %s18 = sphi 0, %s25
    %s19 = sphi 0, %s17
    %s20 = sphi 0, %s18
    %s21 = sphi 0, %s19
    %s22 = sphi 0, %s20
    %s34 = sphi 0, %s36
    %s37 = sphi 0, %s34
    %s38 = sphi 0, %s37
    %s54 = sphi 0, %s38
    %s62 = sphi 0, %s64
    %s65 = sphi 0, %s62
    %s66 = sphi 0, %s65
    %s82 = sphi 0, %s66
    %s86 = sphi 0, %s86
    %s88 = sphi 0, %s86
    %s89 = sphi 0, %s88
    %s103 = sphi 0, %s89
    %s107 = sphi 0, %s107
    %s109 = sphi 0, %s107
    %s110 = sphi 0, %s109
    %s124 = sphi 0, %s110
    %s132 = sphi 0, %s134
    %s135 = sphi 0, %s132
    %s136 = sphi 0, %s135
    %s152 = sphi 0, %s136
  $region4: #{dfa_forward.1} parent=0 // loop_header_branch
    %13 = sbr.rel (%p11) target = $region8
  $region5: #{dfa_forward.1} parent=0 // loop_body
    %s15 = ssub.s32 %s10, 1
    %s16 = ssub.s32 %s10, 2
    %s23 = sadd.s32 1, %s18
    %p24 = scmp.ge.s32.totalorder %s23, 2
    %s25 = scalar_select %p24, 0, %s23
    %s26 = sadd.s32 1, %s17
    %s27 = scalar_select %p24, %s26, %s17
    %p28 = scmp.ge.s32.totalorder %s27, 1
    %s29 = scalar_select %p28, 0, %s27
    %s30 = ssub.s32 %s18, %s25
    %s31 = ssub.s32 %s17, %s29
    %s32 = sor.u32 %s30, %s31
    %p33 = scmp.eq.s32.totalorder %s32, 0
    %s35 = sadd.s32 %s34, 1
    %s36 = scalar_select %p33, %s34, %s35
    %p39 = pneg %p33
    %p40 = scmp.eq.s32.totalorder %s10, 1
    %p41 = por %p39, %p40
    %p42 = scmp.ne.s32.totalorder %s34, %s37
    %p43 = scmp.eq.s32.totalorder %s10, 0
    %p44 = por %p42, %p43
    %p45 = scmp.ne.s32.totalorder %s34, %s37
    %p46 = scmp.eq.s32.totalorder %s15, 1
    %p47 = por %p45, %p46
    %p48 = scmp.ne.s32.totalorder %s37, %s38
    %p49 = scmp.eq.s32.totalorder %s15, 0
    %p50 = por %p48, %p49
    %p51 = scmp.ne.s32.totalorder %s37, %s38
    %p52 = scmp.eq.s32.totalorder %s16, 1
    %p53 = por %p51, %p52
    %p55 = scmp.ne.s32.totalorder %s38, %s54
    %p56 = scmp.eq.s32.totalorder %s16, 0
    %p57 = por %p55, %p56
    %s58 = ssub.s32 %s18, %s25
    %s59 = ssub.s32 %s17, %s29
    %s60 = sor.u32 %s58, %s59
    %p61 = scmp.eq.s32.totalorder %s60, 0
    %s63 = sadd.s32 %s62, 1
    %s64 = scalar_select %p61, %s62, %s63
    %p67 = pneg %p61
    %p68 = scmp.eq.s32.totalorder %s10, 1
    %p69 = por %p67, %p68
    %p70 = scmp.ne.s32.totalorder %s62, %s65
    %p71 = scmp.eq.s32.totalorder %s10, 0
    %p72 = por %p70, %p71
    %p73 = scmp.ne.s32.totalorder %s62, %s65
    %p74 = scmp.eq.s32.totalorder %s15, 1
    %p75 = por %p73, %p74
    %p76 = scmp.ne.s32.totalorder %s65, %s66
    %p77 = scmp.eq.s32.totalorder %s15, 0
    %p78 = por %p76, %p77
    %p79 = scmp.ne.s32.totalorder %s65, %s66
    %p80 = scmp.eq.s32.totalorder %s16, 1
    %p81 = por %p79, %p80
    %p83 = scmp.ne.s32.totalorder %s66, %s82
    %p84 = scmp.eq.s32.totalorder %s16, 0
    %p85 = por %p83, %p84
    %s87 = sadd.s32 %s86, 1
    %p90 = scmp.eq.s32.totalorder %s10, 1
    %p91 = scmp.ne.s32.totalorder %s86, %s88
    %p92 = scmp.eq.s32.totalorder %s10, 0
    %p93 = por %p91, %p92
    %p94 = scmp.ne.s32.totalorder %s86, %s88
    %p95 = scmp.eq.s32.totalorder %s15, 1
    %p96 = por %p94, %p95
    %p97 = scmp.ne.s32.totalorder %s88, %s89
    %p98 = scmp.eq.s32.totalorder %s15, 0
    %p99 = por %p97, %p98
    %p100 = scmp.ne.s32.totalorder %s88, %s89
    %p101 = scmp.eq.s32.totalorder %s16, 1
    %p102 = por %p100, %p101
    %p104 = scmp.ne.s32.totalorder %s89, %s103
    %p105 = scmp.eq.s32.totalorder %s16, 0
    %p106 = por %p104, %p105
    %s108 = sadd.s32 %s107, 1
    %p111 = scmp.eq.s32.totalorder %s10, 1
    %p112 = scmp.ne.s32.totalorder %s107, %s109
    %p113 = scmp.eq.s32.totalorder %s10, 0
    %p114 = por %p112, %p113
    %p115 = scmp.ne.s32.totalorder %s107, %s109
    %p116 = scmp.eq.s32.totalorder %s15, 1
    %p117 = por %p115, %p116
    %p118 = scmp.ne.s32.totalorder %s109, %s110
    %p119 = scmp.eq.s32.totalorder %s15, 0
    %p120 = por %p118, %p119
    %p121 = scmp.ne.s32.totalorder %s109, %s110
    %p122 = scmp.eq.s32.totalorder %s16, 1
    %p123 = por %p121, %p122
    %p125 = scmp.ne.s32.totalorder %s110, %s124
    %p126 = scmp.eq.s32.totalorder %s16, 0
    %p127 = por %p125, %p126
    %s128 = ssub.s32 %s18, %s25
    %s129 = ssub.s32 %s17, %s29
    %s130 = sor.u32 %s128, %s129
    %p131 = scmp.eq.s32.totalorder %s130, 0
    %s133 = sadd.s32 %s132, 1
    %s134 = scalar_select %p131, %s132, %s133
    %p137 = pneg %p131
    %p138 = scmp.eq.s32.totalorder %s10, 1
    %p139 = por %p137, %p138
    %p140 = scmp.ne.s32.totalorder %s132, %s135
    %p141 = scmp.eq.s32.totalorder %s10, 0
    %p142 = por %p140, %p141
    %p143 = scmp.ne.s32.totalorder %s132, %s135
    %p144 = scmp.eq.s32.totalorder %s15, 1
    %p145 = por %p143, %p144
    %p146 = scmp.ne.s32.totalorder %s135, %s136
    %p147 = scmp.eq.s32.totalorder %s15, 0
    %p148 = por %p146, %p147
    %p149 = scmp.ne.s32.totalorder %s135, %s136
    %p150 = scmp.eq.s32.totalorder %s16, 1
    %p151 = por %p149, %p150
    %p153 = scmp.ne.s32.totalorder %s136, %s152
    %p154 = scmp.eq.s32.totalorder %s16, 0
    %p155 = por %p153, %p154
    %p156 = scmp.le.s32.totalorder 1, %s10
    %p157 = scmp.lt.s32.totalorder %s10, 3
    %p158 = pnand %p156, %p157
    %p159 = pneg %p158
    // Predicated region
    $region9: #{dfa_forward.1} parent=5 // pred_check
      _
    $region10: #{dfa_forward.1} parent=5 // pred_check_branch
      %161 = sbr.rel (%p158) target = $region12
    $region11: #{dfa_forward.1} parent=5 // pred_region
      %s162 = ssub.s32 %s10, 1
      // Predicated region
      $region13: #{dfa_forward.1} parent=11 // pred_check
        %p163 = pneg %p99
      $region14: #{dfa_forward.1} parent=11 // pred_check_branch
        %165 = sbr.rel (%p163) target = $region16
      $region15: #{dfa_forward.1} parent=11 // pred_region
        _
      $region16: #{dfa_forward.1} parent=11 // pred_fallthru
        _
      // Predicated region
      $region17: #{dfa_forward.1} parent=11 // pred_check
        %p166 = pneg %p120
      $region18: #{dfa_forward.1} parent=11 // pred_check_branch
        %168 = sbr.rel (%p166) target = $region20
      $region19: #{dfa_forward.1} parent=11 // pred_region
        _
      $region20: #{dfa_forward.1} parent=11 // pred_fallthru
        _
    $region12: #{dfa_forward.1} parent=5 // pred_fallthru
      _
    %p169 = scmp.lt.s32.totalorder %s10, 2
    // Predicated region
    $region21: #{dfa_forward.1} parent=5 // pred_check
      %p170 = pneg %p169
    $region22: #{dfa_forward.1} parent=5 // pred_check_branch
      %172 = sbr.rel (%p170) target = $region24
    $region23: #{dfa_forward.1} parent=5 // pred_region
      // Predicated region
      $region25: #{dfa_forward.1} parent=23 // pred_check
        %p173 = pneg %p44
      $region26: #{dfa_forward.1} parent=23 // pred_check_branch
        %175 = sbr.rel (%p173) target = $region28
      $region27: #{dfa_forward.1} parent=23 // pred_region
        %p176 = scmp.lt.s32.totalorder %s18, 1
        %s177 = scalar_select %p176, %s18, 1
        %p178 = scmp.lt.s32.totalorder %s17, 0
        %s179 = scalar_select %p178, %s17, 0
        %s180 = sadd.s32 %s179, %s177
        %s181 = smul.addr %s180, 8
        %s182 = scalar_lea.vmem %s0, %s181
      $region28: #{dfa_forward.1} parent=23 // pred_fallthru
        _
      // Predicated region
      $region29: #{dfa_forward.1} parent=23 // pred_check
        %p183 = pneg %p72
      $region30: #{dfa_forward.1} parent=23 // pred_check_branch
        %185 = sbr.rel (%p183) target = $region32
      $region31: #{dfa_forward.1} parent=23 // pred_region
        %p186 = scmp.lt.s32.totalorder %s18, 1
        %s187 = scalar_select %p186, %s18, 1
        %p188 = scmp.lt.s32.totalorder %s17, 0
        %s189 = scalar_select %p188, %s17, 0
        %s190 = sadd.s32 %s189, %s187
        %s191 = smul.addr %s190, 8
        %s192 = scalar_lea.vmem %s1, %s191
      $region32: #{dfa_forward.1} parent=23 // pred_fallthru
        _
    $region24: #{dfa_forward.1} parent=5 // pred_fallthru
      _
    %p193 = scmp.le.s32.totalorder 1, %s10
    %p194 = scmp.lt.s32.totalorder %s10, 3
    %p195 = pnand %p193, %p194
    %p196 = pneg %p195
    // Predicated region
    $region33: #{dfa_forward.1} parent=5 // pred_check
      _
    $region34: #{dfa_forward.1} parent=5 // pred_check_branch
      %198 = sbr.rel (%p195) target = $region36
    $region35: #{dfa_forward.1} parent=5 // pred_region
      %s199 = ssub.s32 %s10, 1
      %p200 = scmp.lt.s32.totalorder %s20, 1
      %s201 = scalar_select %p200, %s20, 1
      %p202 = scmp.lt.s32.totalorder %s19, 0
      %s203 = scalar_select %p202, %s19, 0
      %s204 = sadd.s32 %s203, %s201
      %s205 = smul.addr %s204, 8
      %s206 = scalar_lea.vmem %s0, %s205
      %p207 = pneg %p50
      %p208 = pneg %p47
      %p209 = scmp.lt.s32.totalorder %s20, 1
      %s210 = scalar_select %p209, %s20, 1
      %p211 = scmp.lt.s32.totalorder %s19, 0
      %s212 = scalar_select %p211, %s19, 0
      %s213 = sadd.s32 %s212, %s210
      %s214 = smul.addr %s213, 8
      %s215 = scalar_lea.vmem %s1, %s214
      %p216 = pneg %p78
      %p217 = pneg %p75
      %p218 = pneg %p99
      %p219 = pneg %p96
      %p220 = pneg %p120
      %p221 = pneg %p117
      %p222 = pneg %p148
      %p223 = pneg %p145
      %p224 = scmp.lt.s32.totalorder %s20, 1
      %s225 = scalar_select %p224, %s20, 1
      %p226 = scmp.lt.s32.totalorder %s19, 0
      %s227 = scalar_select %p226, %s19, 0
      %s228 = sadd.s32 %s227, %s225
      %s229 = smul.addr %s228, 8
      %s230 = scalar_lea.vmem %s4, %s229
      %p231 = scmp.lt.s32.totalorder %s20, 1
      %s232 = scalar_select %p231, %s20, 1
      %p233 = scmp.lt.s32.totalorder %s19, 0
      %s234 = scalar_select %p233, %s19, 0
      %s235 = sadd.s32 %s234, %s232
      %s236 = smul.addr %s235, 8
      %s237 = scalar_lea.vmem %s0, %s236
      %p238 = scmp.lt.s32.totalorder %s20, 1
      %s239 = scalar_select %p238, %s20, 1
      %p240 = scmp.lt.s32.totalorder %s19, 0
      %s241 = scalar_select %p240, %s19, 0
      %s242 = sadd.s32 %s241, %s239
      %s243 = smul.addr %s242, 8
      %s244 = scalar_lea.vmem %s1, %s243
      %p245 = scmp.lt.s32.totalorder %s20, 1
      %s246 = scalar_select %p245, %s20, 1
      %p247 = scmp.lt.s32.totalorder %s19, 0
      %s248 = scalar_select %p247, %s19, 0
      %s249 = sadd.s32 %s248, %s246
      %s250 = smul.addr %s249, 8
      %s251 = scalar_lea.vmem %s4, %s250
      %v253 = vld [vmem:[%s237] sm:$0xff]
      %v254 = vld [vmem:[%s244] sm:$0xff]
      %v255 = vadd.f32 %v253, %v254
      %v256 = vpack.c.bf16 %v255, %v255
      %v257 = vld [vmem:[%s2] sm:$0xf]
      %v258 = vld [vmem:[%s3] sm:$0xff]
      %260 = vset.pattern.permute.xlu0 0
      %261 = vperm.xlu0 %260, %v258
      %v262 = vpop.permute.xlu0 %261
      %vm264 = vcmask 64512
      %v266 = vsel %vm264, %v257, 0
      %vm268 = vcmask 1043456
      %v270 = vsel %vm268, %v256, 0
      %272 = vmatprep.subr.bf16.mxu0 0
      %273 = vmatpush1.bf16.msra.mxu0 %v270
      %274 = vmatprep.subr.bf16.mxu0 0
      %275 = vmatpush1.bf16.msra.mxu0 0
      %276 = vmatprep.subr.bf16.mxu0 0
      %277 = vmatpush1.bf16.msra.mxu0 0
      %278 = vmatprep.subr.bf16.mxu0 0
      %279 = vmatpush1.bf16.msra.mxu0 0
      %280 = vmatprep.subr.bf16.mxu0 0
      %281 = vmatpush1.bf16.msra.mxu0 0
      %282 = vmatprep.subr.bf16.mxu0 0
      %283 = vmatpush1.bf16.msra.mxu0 0
      %284 = vmatprep.subr.bf16.mxu0 0
      %285 = vmatpush1.bf16.msra.mxu0 0
      %286 = vmatprep.subr.bf16.mxu0 0
      %287 = vmatpush1.bf16.msra.mxu0 0
      %288 = vmatprep.subr.bf16.mxu0 0
      %289 = vmatpush1.bf16.msra.mxu0 0
      %290 = vmatprep.subr.bf16.mxu0 0
      %291 = vmatpush1.bf16.msra.mxu0 0
      %292 = vmatprep.subr.bf16.mxu0 0
      %293 = vmatpush1.bf16.msra.mxu0 0
      %294 = vmatprep.subr.bf16.mxu0 0
      %295 = vmatpush1.bf16.msra.mxu0 0
      %296 = vmatprep.subr.bf16.mxu0 0
      %297 = vmatpush1.bf16.msra.mxu0 0
      %298 = vmatprep.subr.bf16.mxu0 0
      %299 = vmatpush1.bf16.msra.mxu0 0
      %300 = vmatprep.subr.bf16.mxu0 0
      %301 = vmatpush1.bf16.msra.mxu0 0
      %302 = vmatprep.subr.bf16.mxu0 0
      %303 = vmatpush1.bf16.msra.mxu0 0
      %304 = vmatprep.mubr.bf16.mxu0 0
      %305 = vmatmul.mubr.bf16.gmra.mrb[0].mxu0 %v266
      %v306 = vpop.f32.mrb[0].mxu0
      %v307 = vadd.f32 %v262, %v306
      %v308 = vpop.f32.mrb[0].mxu0
      %v309 = vpop.f32.mrb[0].mxu0
      %v310 = vpop.f32.mrb[0].mxu0
      %311 = vdwg.mxu0
      %v312 = vxor.u32 %v307, 2147483648
      %v313 = vmul.f32 %v312, 1.442695
      %v314 = vpow.pop %v313
      %v315 = vadd.f32 %v314, 1.0
      %v316 = vrcp.pop %v315
      %v317 = vmul.f32 1.0, %v316
      %v318 = vsub.f32 %v253, %v254
      %v319 = vmul.f32 %v317, %v318
      %v320 = vadd.f32 %v254, %v319
      %321 = vst [vmem:[%s251] sm:$0xff] %v320
      %p322 = scmp.lt.s32.totalorder %s20, 1
      %s323 = scalar_select %p322, %s20, 1
      %p324 = scmp.lt.s32.totalorder %s19, 0
      %s325 = scalar_select %p324, %s19, 0
      %s326 = sadd.s32 %s325, %s323
      %s327 = smul.addr %s326, 8
      %s328 = scalar_lea.vmem %s4, %s327
      // Predicated region
      $region37: #{dfa_forward.1} parent=35 // pred_check
        %p329 = pneg %p145
      $region38: #{dfa_forward.1} parent=35 // pred_check_branch
        %331 = sbr.rel (%p329) target = $region40
      $region39: #{dfa_forward.1} parent=35 // pred_region
        _
      $region40: #{dfa_forward.1} parent=35 // pred_fallthru
        _
    $region36: #{dfa_forward.1} parent=5 // pred_fallthru
      _
    %p332 = scmp.le.s32.totalorder 2, %s10
    // Predicated region
    $region41: #{dfa_forward.1} parent=5 // pred_check
      %p333 = pneg %p332
    $region42: #{dfa_forward.1} parent=5 // pred_check_branch
      %335 = sbr.rel (%p333) target = $region44
    $region43: #{dfa_forward.1} parent=5 // pred_region
      %s336 = ssub.s32 %s10, 2
      // Predicated region
      $region45: #{dfa_forward.1} parent=43 // pred_check
        %p337 = pneg %p151
      $region46: #{dfa_forward.1} parent=43 // pred_check_branch
        %339 = sbr.rel (%p337) target = $region48
      $region47: #{dfa_forward.1} parent=43 // pred_region
        %p340 = scmp.lt.s32.totalorder %s22, 1
        %s341 = scalar_select %p340, %s22, 1
        %p342 = scmp.lt.s32.totalorder %s21, 0
        %s343 = scalar_select %p342, %s21, 0
        %s344 = sadd.s32 %s343, %s341
        %s345 = smul.addr %s344, 8
        %s346 = scalar_lea.vmem %s4, %s345
      $region48: #{dfa_forward.1} parent=43 // pred_fallthru
        _
    $region44: #{dfa_forward.1} parent=5 // pred_fallthru
      _
  $region6: #{dfa_forward.1} parent=0 // loop_footer
    %s14 = sadd.s32 1, %s10
  $region7: #{dfa_forward.1} parent=0 // loop_footer_branch
    %9 = sbr.rel target = $region3
  $region8: #{dfa_forward.1} parent=0 // loop_exit
    _

</llo_original>
